<compile_context>
chip_gen: v6e
topology: v6e:2x2x1
jax: 0.10.0
libtpu: 0.0.40
codegen_flags: <defaults>
</compile_context>

<pallas_src>
import functools

import numpy as np
import jax
import jax.numpy as jnp
from jax.experimental import pallas as pl
from jax.experimental.pallas import tpu as pltpu


def _round_up(x: int, m: int) -> int:
    return ((x + m - 1) // m) * m


@functools.lru_cache(maxsize=None)
def _vmem_budget() -> int:
    """~85% of this generation's VMEM capacity (fallback: v7x's 64 MiB)."""
    cap = 64 << 20
    try:
        cap = int(getattr(pltpu.get_tpu_info(), "vmem_capacity_bytes", cap))
    except Exception:
        pass
    return int(cap * 0.85)


@functools.lru_cache(maxsize=None)
def _build_dft_weight(n_fft: int, n_rows: int, half_pad: int) -> np.ndarray:
    """Real DFT matrix reproducing np.fft.fft -> fftshift -> crop -> /N_fft.

    Columns: [Re(crop) | zeros to half_pad | Im(crop) | zeros to half_pad];
    rows beyond n_fft are zero.  Hence y = x @ W reshapes for free to
    (B, 2, half_pad) and sum(y*y) over the padded width equals the true norm.
    """
    crop = (n_fft + 1) // 2
    freqs = np.fft.fftshift(np.arange(n_fft))[:crop]              # kept freqs
    n = np.arange(n_fft)
    angle = 2.0 * np.pi * np.outer(n, freqs) / n_fft              # (N, crop)
    w = np.zeros((n_rows, 2 * half_pad), dtype=np.float32)
    w[:n_fft, :crop] = np.cos(angle) / n_fft                      # Re
    w[:n_fft, half_pad:half_pad + crop] = -np.sin(angle) / n_fft  # Im
    return w


def _write_logpz(y, logpz_ref, logpz_const):
    # Lane-dense (TB, 128) store; wrapper reads column 0.
    logpz_ref[...] = jnp.broadcast_to(
        -0.5 * jnp.sum(y * y, axis=-1, keepdims=True) + logpz_const,
        logpz_ref.shape)


def _dft_kernel_single(x_ref, w_ref, y_ref, logpz_ref, *, logpz_const, precision):
    y = jnp.dot(x_ref[...], w_ref[...],
                preferred_element_type=jnp.float32, precision=precision)
    y_ref[...] = y
    _write_logpz(y, logpz_ref, logpz_const)


def _dft_kernel_multik(x_ref, w_ref, y_ref, logpz_ref, *, logpz_const, precision):
    k = pl.program_id(1)
    part = jnp.dot(x_ref[...], w_ref[...],
                   preferred_element_type=jnp.float32, precision=precision)

    # y_ref's block index is constant across k -> resident; use it directly
    # as the accumulator (no VMEM scratch, no finalize copy).
    @pl.when(k == 0)
    def _():
        y_ref[...] = part

    @pl.when(k > 0)
    def _():
        y_ref[...] += part

    @pl.when(k == pl.num_programs(1) - 1)
    def _():
        _write_logpz(y_ref[...], logpz_ref, logpz_const)


def _choose_tb(batch: int, tb_fit: int) -> int:
    tb = max(8, min(tb_fit, 1024, _round_up(batch, 8)))
    if batch > 8:  # keep >=2 batch tiles so both v7x TensorCores get work
        tb = min(tb, _round_up((batch + 1) // 2, 8))
    return tb


@functools.partial(jax.jit, static_argnames=("n_fft",))
def _dft_forward_impl(x, n_fft: int):
    B, N = x.shape
    crop = (n_fft + 1) // 2
    half_pad = _round_up(crop, 128)          # lane-aligned Re/Im half width
    d_pad = 2 * half_pad
    logpz_const = float(-0.5 * (2 * crop) * np.log(2.0 * np.pi))
    precision = jax.lax.Precision.HIGHEST
    budget = _vmem_budget()

    x = x.astype(jnp.float32)
    w_bytes = 4 * N * d_pad

    if 2 * w_bytes <= budget // 2:
        # ---- single-K fast path: whole DFT matrix resident in VMEM ----
        per_row = 4 * (2 * N + 2 * d_pad + 2 * 128)   # dbl-buffered x + y + logpz
        tb = _choose_tb(B, ((budget - 2 * w_bytes) // per_row) // 8 * 8)
        grid = (-(-B // tb),)
        w = jnp.asarray(_build_dft_weight(n_fft, N, half_pad))
        kernel = functools.partial(_dft_kernel_single,
                                   logpz_const=logpz_const, precision=precision)
        in_specs = [
            pl.BlockSpec((tb, N), lambda b: (b, 0)),      # x streams, no pad copy
            pl.BlockSpec((N, d_pad), lambda b: (0, 0)),   # W resident across b
        ]
        out_specs = (
            pl.BlockSpec((tb, d_pad), lambda b: (b, 0)),
            pl.BlockSpec((tb, 128), lambda b: (b, 0)),
        )
        dim_sem = ("parallel",)
        operands = (x, w)
    else:
        # ---- multi-K path (very large n_fft): tile the contraction dim ----
        tk_fit = ((budget // 3) // (2 * 4 * d_pad)) // 128 * 128
        tk = min(_round_up(N, 128), max(128, tk_fit))
        n_pad = _round_up(N, tk)
        per_row = 4 * (2 * tk + 2 * d_pad + 2 * 128)
        tb = _choose_tb(B, ((budget - 2 * 4 * tk * d_pad) // per_row) // 8 * 8)
        grid = (-(-B // tb), n_pad // tk)
        w = jnp.asarray(_build_dft_weight(n_fft, n_pad, half_pad))
        # Zero-pad x columns only (padded K tiles must be exactly 0 so nothing
        # spurious enters the contraction).  Rows stay unpadded / ragged.
        x_op = jnp.pad(x, ((0, 0), (0, n_pad - N)))
        kernel = functools.partial(_dft_kernel_multik,
                                   logpz_const=logpz_const, precision=precision)
        in_specs = [
            pl.BlockSpec((tb, tk), lambda b, k: (b, k)),
            pl.BlockSpec((tk, d_pad), lambda b, k: (k, 0)),
        ]
        out_specs = (
            pl.BlockSpec((tb, d_pad), lambda b, k: (b, 0)),   # resident over k
            pl.BlockSpec((tb, 128), lambda b, k: (b, 0)),
        )
        dim_sem = ("parallel", "arbitrary")
        operands = (x_op, w)
        # TODO(synk): for extreme n_fft where a (tb, d_pad) output block no
        # longer fits VMEM, the output columns also need tiling with a
        # per-column-tile log_pz accumulation.

    y, logpz = pl.pallas_call(
        kernel,
        out_shape=(
            jax.ShapeDtypeStruct((B, d_pad), jnp.float32),
            jax.ShapeDtypeStruct((B, 128), jnp.float32),
        ),
        grid=grid,
        in_specs=in_specs,
        out_specs=out_specs,
        compiler_params=pltpu.CompilerParams(
            dimension_semantics=dim_sem,
            vmem_limit_bytes=int(budget),
        ),
    )(*operands)

    x_fft = y.reshape(B, 2, half_pad)[:, :, :crop]   # reshape is a free view
    log_pz = logpz[:, 0]
    return x_fft, log_pz


def dft_forward(x, n_fft: int):
    """Pallas implementation of DFT.forward.

    Returns (x_fft (B, 2, crop) f32, log_pz (B,) f32, log_jacob = 0).
    """
    x = jnp.asarray(x)
    if x.ndim == 1:
        x = x.reshape((1, -1))
    assert x.shape[-1] == n_fft, "input length must equal N_fft"
    x_fft, log_pz = _dft_forward_impl(x.astype(jnp.float32), n_fft)
    log_jacob = 0   # Vandermonde linear transform -> log|det J| = 0
    return x_fft, log_pz, log_jacob


if __name__ == "__main__":
    N_FFT = 16            # small DFT size (module default is 100)
    BATCH = 4

    key = jax.random.PRNGKey(0)
    x = jax.random.normal(key, (BATCH, N_FFT), dtype=jnp.float32)

    x_fft, log_pz, log_jacob = dft_forward(x, N_FFT)
    jax.block_until_ready((x_fft, log_pz))

    # Reference check against the numpy-FFT semantics of the PyTorch module.
    crop = int(np.ceil(N_FFT / 2))
    x_np = np.asarray(x)
    ref = np.array([
        np.array([
            np.real(np.fft.fftshift(np.fft.fft(x_np[k])))[:crop] / N_FFT,
            np.imag(np.fft.fftshift(np.fft.fft(x_np[k])))[:crop] / N_FFT,
        ]) for k in range(BATCH)
    ]).astype(np.float32)
    ref_logpz = (-0.5 * np.sum(ref.reshape(BATCH, -1) ** 2, axis=-1)
                 - 0.5 * 2 * crop * np.log(2 * np.pi)).astype(np.float32)

    assert np.allclose(np.asarray(x_fft), ref, atol=1e-5), "x_fft mismatch"
    assert np.allclose(np.asarray(log_pz), ref_logpz, atol=1e-4), "log_pz mismatch"
    assert int(log_jacob) == 0

    print("KERNEL_OK")
</pallas_src>

<mosaic_0001>
module attributes {stable_mosaic.version = 11 : i64} {
  func.func @_dft_kernel_single(%arg0: i32, %arg1: memref<8x16xf32, #tpu.memory_space<vmem>>, %arg2: memref<16x256xf32, #tpu.memory_space<vmem>>, %arg3: memref<8x256xf32, #tpu.memory_space<vmem>>, %arg4: memref<8x128xf32, #tpu.memory_space<vmem>>) attributes {dimension_semantics = [#tpu.dimension_semantics<parallel>], iteration_bounds = array<i64: 1>, scalar_prefetch = 0 : i64, scratch_operands = 0 : i64, tpu.core_type = #tpu.core_type<tc>, window_params = [{transform_indices = @transform_0, window_bounds = array<i64: 8, 16>}, {pipeline_mode = #tpu.pipeline_mode<synchronous>, transform_indices = @transform_1, window_bounds = array<i64: 16, 256>}, {transform_indices = @transform_2, window_bounds = array<i64: 8, 256>}, {transform_indices = @transform_3, window_bounds = array<i64: 8, 128>}]} {
    %c0 = arith.constant 0 : index
    %c0_0 = arith.constant 0 : index
    %0 = vector.load %arg1[%c0, %c0_0] : memref<8x16xf32, #tpu.memory_space<vmem>>, vector<8x16xf32>
    %c0_1 = arith.constant 0 : index
    %c0_2 = arith.constant 0 : index
    %1 = vector.load %arg2[%c0_1, %c0_2] : memref<16x256xf32, #tpu.memory_space<vmem>>, vector<16x256xf32>
    %cst = arith.constant dense<0.000000e+00> : vector<8x256xf32>
    %2 = tpu.matmul %0, %1, %cst {dimension_numbers = #tpu.dot_dimension_numbers<[1], [0], [0], [1], [0, 0, 1, 1], [], []>, precision = #tpu.contract_precision<fp32>} : vector<8x16xf32>, vector<16x256xf32>, vector<8x256xf32> -> vector<8x256xf32>
    %c0_3 = arith.constant 0 : index
    %c0_4 = arith.constant 0 : index
    %3 = vector.load %arg3[%c0_3, %c0_4] : memref<8x256xf32, #tpu.memory_space<vmem>>, vector<8x256xf32>
    tpu.vector_store %arg3[%c0_3, %c0_4], %2 {strides = array<i32>} : memref<8x256xf32, #tpu.memory_space<vmem>>, vector<8x256xf32>,
    %4 = arith.mulf %2, %2 : vector<8x256xf32>
    %cst_5 = arith.constant dense<0.000000e+00> : vector<8xf32>
    %5 = vector.multi_reduction <add>, %4, %cst_5 [1] : vector<8x256xf32> to vector<8xf32>
    %6 = vector.shape_cast %5 : vector<8xf32> to vector<8x1xf32>
    %cst_6 = arith.constant -5.000000e-01 : f32
    %7 = vector.broadcast %cst_6 : f32 to vector<8x1xf32>
    %8 = arith.mulf %7, %6 : vector<8x1xf32>
    %cst_7 = arith.constant -14.7030163 : f32
    %9 = vector.broadcast %cst_7 : f32 to vector<8x1xf32>
    %10 = arith.addf %8, %9 : vector<8x1xf32>
    %11 = vector.shape_cast %10 : vector<8x1xf32> to vector<8x1xf32>
    %12 = vector.broadcast %11 : vector<8x1xf32> to vector<8x128xf32>
    %c0_8 = arith.constant 0 : index
    %c0_9 = arith.constant 0 : index
    %13 = vector.load %arg4[%c0_8, %c0_9] : memref<8x128xf32, #tpu.memory_space<vmem>>, vector<8x128xf32>
    tpu.vector_store %arg4[%c0_8, %c0_9], %12 {strides = array<i32>} : memref<8x128xf32, #tpu.memory_space<vmem>>, vector<8x128xf32>,
    return
  }
  func.func @transform_0(%arg0: i32) -> (i32, i32) {
    %c0_i32 = arith.constant 0 : i32
    %c0_i32_0 = arith.constant 0 : i32
    return %arg0, %c0_i32 : i32, i32
  }
  func.func @transform_1(%arg0: i32) -> (i32, i32) {
    %c0_i32 = arith.constant 0 : i32
    %c0_i32_0 = arith.constant 0 : i32
    %c0_i32_1 = arith.constant 0 : i32
    return %c0_i32, %c0_i32_0 : i32, i32
  }
  func.func @transform_2(%arg0: i32) -> (i32, i32) {
    %c0_i32 = arith.constant 0 : i32
    %c0_i32_0 = arith.constant 0 : i32
    return %arg0, %c0_i32 : i32, i32
  }
  func.func @transform_3(%arg0: i32) -> (i32, i32) {
    %c0_i32 = arith.constant 0 : i32
    %c0_i32_0 = arith.constant 0 : i32
    return %arg0, %c0_i32 : i32, i32
  }
}

</mosaic_0001>

<llo_original>
// kernel: _dft_forward_impl.1
$region0: #{_dft_forward_impl.1}
  #allocation0 [shape = 'u32[]', space=smem, size = 0x4, offset = 0x4, fixed_abs, tag = 'smem constant byte address 0x4 - core index']
  #allocation1 [shape = 'u32[144,128]{1,0:T(1,128)}', space=vmem, size = 0x12000, scoped, tag = 'internal scratch']
  %s0 = inlined_call_operand.hbm [shape: f32[4,16], index: 0, kind: input, shape index: {}]
  %s1 = inlined_call_operand.hbm [shape: f32[16,256], index: 1, kind: input, shape index: {}]
  %s2 = inlined_call_operand.vmem [shape: f32[4,256], index: 2, kind: output, shape index: {0}]
  %s3 = inlined_call_operand.vmem [shape: f32[4,128], index: 3, kind: output, shape index: {1}]
  %4 = xla_tuple %s2, %s3
  %s5 = sld [smem:[#allocation0]]
  $region98: #{_dft_forward_impl.1} parent=0
    _
  %s7 = ssub.s32 1, %s5
  %s8 = scalar_select 0, %s7, %s5
  $region1: #{_dft_forward_impl.1} parent=0
    #allocation2 [shape = 'u8[4096]{0}', space=vmem, size = 0x1000, scoped, tag = 'input window, operand 0, single buffered']
    #allocation3 [shape = 's32[1]{0}', space=sflag, size = 0x4, scoped, tag = 'scoped memory for _dft_forward_impl.1']
    #allocation4 [shape = 'u8[16384]{0}', space=vmem, size = 0x4000, scoped, tag = 'input window, operand 1, single buffered']
    #allocation5 [shape = 's32[1]{0}', space=sflag, size = 0x4, scoped, tag = 'scoped memory for _dft_forward_impl.1']
    #allocation6 [shape = 'u8[8192]{0}', space=vmem, size = 0x2000, scoped, tag = 'output window, operand 0, single buffered']
    #allocation7 [shape = 'u8[4096]{0}', space=vmem, size = 0x1000, scoped, tag = 'output window, operand 1, single buffered']
    %9 = vsyncpa [#allocation3], 0
    %10 = vsyncpa [#allocation5], 0
    // Predicated region
    $region2: #{_dft_forward_impl.1} parent=1 // pred_check
      _
    $region3: #{_dft_forward_impl.1} parent=1 // pred_check_branch
      %12 = sbr.rel (0) target = $region5
    $region4: #{_dft_forward_impl.1} parent=1 // pred_region
      %s14 = ssub.s32 128, 64
      %15 = vsyncadd [#allocation3], %s14
      %s16 = sshll.u32 [#allocation2], 4
      %s17 = int_to_ptr.vmem [resolvable:$true] %s16
      %22 = dma.hbm_to_vmem [thread:$0]  %s0, 64, %s17, [#allocation3], 64, 64, 4
    $region5: #{_dft_forward_impl.1} parent=1 // pred_fallthru
      _
    // Predicated region
    $region6: #{_dft_forward_impl.1} parent=1 // pred_check
      _
    $region7: #{_dft_forward_impl.1} parent=1 // pred_check_branch
      %24 = sbr.rel (0) target = $region9
    $region8: #{_dft_forward_impl.1} parent=1 // pred_region
      %s26 = ssub.s32 512, 512
      %27 = vsyncadd [#allocation5], %s26
      %s28 = sshll.u32 [#allocation4], 4
      %s29 = int_to_ptr.vmem [resolvable:$true] %s28
      %34 = dma.hbm_to_vmem [thread:$0]  %s1, 512, %s29, [#allocation5], 256, 256, 16
    $region9: #{_dft_forward_impl.1} parent=1 // pred_fallthru
      _
    // Predicated region
    $region10: #{_dft_forward_impl.1} parent=1 // pred_check
      _
    $region11: #{_dft_forward_impl.1} parent=1 // pred_check_branch
      %36 = sbr.rel (0) target = $region13
    $region12: #{_dft_forward_impl.1} parent=1 // pred_region
      %37 = dma.done [#allocation3], 128
    $region13: #{_dft_forward_impl.1} parent=1 // pred_fallthru
      _
    // Predicated region
    $region14: #{_dft_forward_impl.1} parent=1 // pred_check
      _
    $region15: #{_dft_forward_impl.1} parent=1 // pred_check_branch
      %39 = sbr.rel (0) target = $region17
    $region16: #{_dft_forward_impl.1} parent=1 // pred_region
      %40 = dma.done [#allocation5], 512
    $region17: #{_dft_forward_impl.1} parent=1 // pred_fallthru
      _
    %v41 = vld [vmem:[#allocation2] sm:$0xff]
    %v42 = vld [vmem:[#allocation4] sm:$0xff]
    %v43 = vld [vmem:[#allocation4 + $0x8] sm:$0xff]
    %v44 = vld [vmem:[#allocation4 + $0x10] sm:$0xff]
    %v45 = vld [vmem:[#allocation4 + $0x18] sm:$0xff]
    %vm46 = vcmask 130048
    %v48 = vsel %vm46, %v41, 0
    %50 = vmatprep.subr.mxu0 0.0
    %51 = vmatpush1.msra.mxu0 0.0
    %52 = vmatprep.subr.mxu0 0.0
    %53 = vmatpush1.msra.mxu0 0.0
    %54 = vmatprep.subr.mxu0 0.0
    %55 = vmatpush1.msra.mxu0 0.0
    %56 = vmatprep.subr.mxu0 0.0
    %57 = vmatpush1.msra.mxu0 0.0
    %58 = vmatprep.subr.mxu0 0.0
    %59 = vmatpush1.msra.mxu0 0.0
    %60 = vmatprep.subr.mxu0 0.0
    %61 = vmatpush1.msra.mxu0 0.0
    %62 = vmatprep.subr.mxu0 0.0
    %63 = vmatpush1.msra.mxu0 0.0
    %64 = vmatprep.subr.mxu0 0.0
    %65 = vmatpush1.msra.mxu0 0.0
    %66 = vmatprep.subr.mxu0 0.0
    %67 = vmatpush1.msra.mxu0 0.0
    %68 = vmatprep.subr.mxu0 0.0
    %69 = vmatpush1.msra.mxu0 0.0
    %70 = vmatprep.subr.mxu0 0.0
    %71 = vmatpush1.msra.mxu0 0.0
    %72 = vmatprep.subr.mxu0 0.0
    %73 = vmatpush1.msra.mxu0 0.0
    %74 = vmatprep.subr.mxu0 0.0
    %75 = vmatpush1.msra.mxu0 0.0
    %76 = vmatprep.subr.mxu0 0.0
    %77 = vmatpush1.msra.mxu0 0.0
    %v78 = vand.u32 %v45, 4294901760
    %79 = vmatprep.subr.mxu0 %v78
    %v80 = vand.u32 %v44, 4294901760
    %81 = vmatpush1.msra.mxu0 %v80
    %v82 = vand.u32 %v43, 4294901760
    %83 = vmatprep.subr.mxu0 %v82
    %v84 = vand.u32 %v42, 4294901760
    %85 = vmatpush1.msra.mxu0 %v84
    %86 = vmatprep.subr.mxu0 0.0
    %87 = vmatpush2.msra.mxu0 0.0
    %88 = vmatprep.subr.mxu0 0.0
    %89 = vmatpush2.msra.mxu0 0.0
    %90 = vmatprep.subr.mxu0 0.0
    %91 = vmatpush2.msra.mxu0 0.0
    %92 = vmatprep.subr.mxu0 0.0
    %93 = vmatpush2.msra.mxu0 0.0
    %94 = vmatprep.subr.mxu0 0.0
    %95 = vmatpush2.msra.mxu0 0.0
    %96 = vmatprep.subr.mxu0 0.0
    %97 = vmatpush2.msra.mxu0 0.0
    %98 = vmatprep.subr.mxu0 0.0
    %99 = vmatpush2.msra.mxu0 0.0
    %100 = vmatprep.subr.mxu0 0.0
    %101 = vmatpush2.msra.mxu0 0.0
    %102 = vmatprep.subr.mxu0 0.0
    %103 = vmatpush2.msra.mxu0 0.0
    %104 = vmatprep.subr.mxu0 0.0
    %105 = vmatpush2.msra.mxu0 0.0
    %106 = vmatprep.subr.mxu0 0.0
    %107 = vmatpush2.msra.mxu0 0.0
    %108 = vmatprep.subr.mxu0 0.0
    %109 = vmatpush2.msra.mxu0 0.0
    %110 = vmatprep.subr.mxu0 0.0
    %111 = vmatpush2.msra.mxu0 0.0
    %112 = vmatprep.subr.mxu0 0.0
    %113 = vmatpush2.msra.mxu0 0.0
    %114 = vmatprep.subr.mxu0 0.0
    %115 = vmatpush2.msra.mxu0 0.0
    %116 = vmatprep.subr.mxu0 0.0
    %117 = vmatpush2.msra.mxu0 0.0
    %118 = vmatprep.mubr.f32.mxu0 0.0
    %v119 = vand.u32 %v48, 4294901760
    %v120 = vsub.f32 %v48, %v119
    %v121 = vand.u32 %v120, 4294901760
    %v122 = vsub.f32 %v120, %v121
    %v123 = vand.u32 %v122, 4294901760
    %124 = vmatmul.mubr.f32.gmra.mxu0 %v123
    %v125 = vpop.f32.mrf.mxu0
    %v126 = vadd.f32 0.0, %v125
    %v127 = vpop.f32.mrf.mxu0
    %v128 = vadd.f32 0.0, %v127
    %129 = vdwg.mxu0
    %130 = vmatprep.subr.mxu0 0.0
    %131 = vmatpush1.msra.mxu0 0.0
    %132 = vmatprep.subr.mxu0 0.0
    %133 = vmatpush1.msra.mxu0 0.0
    %134 = vmatprep.subr.mxu0 0.0
    %135 = vmatpush1.msra.mxu0 0.0
    %136 = vmatprep.subr.mxu0 0.0
    %137 = vmatpush1.msra.mxu0 0.0
    %138 = vmatprep.subr.mxu0 0.0
    %139 = vmatpush1.msra.mxu0 0.0
    %140 = vmatprep.subr.mxu0 0.0
    %141 = vmatpush1.msra.mxu0 0.0
    %142 = vmatprep.subr.mxu0 0.0
    %143 = vmatpush1.msra.mxu0 0.0
    %144 = vmatprep.subr.mxu0 0.0
    %145 = vmatpush1.msra.mxu0 0.0
    %146 = vmatprep.subr.mxu0 0.0
    %147 = vmatpush1.msra.mxu0 0.0
    %148 = vmatprep.subr.mxu0 0.0
    %149 = vmatpush1.msra.mxu0 0.0
    %150 = vmatprep.subr.mxu0 0.0
    %151 = vmatpush1.msra.mxu0 0.0
    %152 = vmatprep.subr.mxu0 0.0
    %153 = vmatpush1.msra.mxu0 0.0
    %154 = vmatprep.subr.mxu0 0.0
    %155 = vmatpush1.msra.mxu0 0.0
    %156 = vmatprep.subr.mxu0 0.0
    %157 = vmatpush1.msra.mxu0 0.0
    %v158 = vand.u32 %v45, 4294901760
    %v159 = vsub.f32 %v45, %v158
    %v160 = vand.u32 %v159, 4294901760
    %v161 = vsub.f32 %v159, %v160
    %v162 = vand.u32 %v161, 4294901760
    %163 = vmatprep.subr.mxu0 %v162
    %v164 = vand.u32 %v44, 4294901760
    %v165 = vsub.f32 %v44, %v164
    %v166 = vand.u32 %v165, 4294901760
    %v167 = vsub.f32 %v165, %v166
    %v168 = vand.u32 %v167, 4294901760
    %169 = vmatpush1.msra.mxu0 %v168
    %v170 = vand.u32 %v43, 4294901760
    %v171 = vsub.f32 %v43, %v170
    %v172 = vand.u32 %v171, 4294901760
    %v173 = vsub.f32 %v171, %v172
    %v174 = vand.u32 %v173, 4294901760
    %175 = vmatprep.subr.mxu0 %v174
    %v176 = vand.u32 %v42, 4294901760
    %v177 = vsub.f32 %v42, %v176
    %v178 = vand.u32 %v177, 4294901760
    %v179 = vsub.f32 %v177, %v178
    %v180 = vand.u32 %v179, 4294901760
    %181 = vmatpush1.msra.mxu0 %v180
    %182 = vmatprep.subr.mxu0 0.0
    %183 = vmatpush2.msra.mxu0 0.0
    %184 = vmatprep.subr.mxu0 0.0
    %185 = vmatpush2.msra.mxu0 0.0
    %186 = vmatprep.subr.mxu0 0.0
    %187 = vmatpush2.msra.mxu0 0.0
    %188 = vmatprep.subr.mxu0 0.0
    %189 = vmatpush2.msra.mxu0 0.0
    %190 = vmatprep.subr.mxu0 0.0
    %191 = vmatpush2.msra.mxu0 0.0
    %192 = vmatprep.subr.mxu0 0.0
    %193 = vmatpush2.msra.mxu0 0.0
    %194 = vmatprep.subr.mxu0 0.0
    %195 = vmatpush2.msra.mxu0 0.0
    %196 = vmatprep.subr.mxu0 0.0
    %197 = vmatpush2.msra.mxu0 0.0
    %198 = vmatprep.subr.mxu0 0.0
    %199 = vmatpush2.msra.mxu0 0.0
    %200 = vmatprep.subr.mxu0 0.0
    %201 = vmatpush2.msra.mxu0 0.0
    %202 = vmatprep.subr.mxu0 0.0
    %203 = vmatpush2.msra.mxu0 0.0
    %204 = vmatprep.subr.mxu0 0.0
    %205 = vmatpush2.msra.mxu0 0.0
    %206 = vmatprep.subr.mxu0 0.0
    %207 = vmatpush2.msra.mxu0 0.0
    %208 = vmatprep.subr.mxu0 0.0
    %209 = vmatpush2.msra.mxu0 0.0
    %210 = vmatprep.subr.mxu0 0.0
    %211 = vmatpush2.msra.mxu0 0.0
    %212 = vmatprep.subr.mxu0 0.0
    %213 = vmatpush2.msra.mxu0 0.0
    %214 = vmatprep.mubr.f32.mxu0 0.0
    %v215 = vand.u32 %v48, 4294901760
    %216 = vmatmul.mubr.f32.gmra.mxu0 %v215
    %v217 = vpop.f32.mrf.mxu0
    %v218 = vadd.f32 %v126, %v217
    %v219 = vpop.f32.mrf.mxu0
    %v220 = vadd.f32 %v128, %v219
    %221 = vdwg.mxu0
    %222 = vmatprep.subr.mxu0 0.0
    %223 = vmatpush1.msra.mxu0 0.0
    %224 = vmatprep.subr.mxu0 0.0
    %225 = vmatpush1.msra.mxu0 0.0
    %226 = vmatprep.subr.mxu0 0.0
    %227 = vmatpush1.msra.mxu0 0.0
    %228 = vmatprep.subr.mxu0 0.0
    %229 = vmatpush1.msra.mxu0 0.0
    %230 = vmatprep.subr.mxu0 0.0
    %231 = vmatpush1.msra.mxu0 0.0
    %232 = vmatprep.subr.mxu0 0.0
    %233 = vmatpush1.msra.mxu0 0.0
    %234 = vmatprep.subr.mxu0 0.0
    %235 = vmatpush1.msra.mxu0 0.0
    %236 = vmatprep.subr.mxu0 0.0
    %237 = vmatpush1.msra.mxu0 0.0
    %238 = vmatprep.subr.mxu0 0.0
    %239 = vmatpush1.msra.mxu0 0.0
    %240 = vmatprep.subr.mxu0 0.0
    %241 = vmatpush1.msra.mxu0 0.0
    %242 = vmatprep.subr.mxu0 0.0
    %243 = vmatpush1.msra.mxu0 0.0
    %244 = vmatprep.subr.mxu0 0.0
    %245 = vmatpush1.msra.mxu0 0.0
    %246 = vmatprep.subr.mxu0 0.0
    %247 = vmatpush1.msra.mxu0 0.0
    %248 = vmatprep.subr.mxu0 0.0
    %249 = vmatpush1.msra.mxu0 0.0
    %v250 = vand.u32 %v45, 4294901760
    %v251 = vsub.f32 %v45, %v250
    %252 = vmatprep.subr.mxu0 %v251
    %v253 = vand.u32 %v44, 4294901760
    %v254 = vsub.f32 %v44, %v253
    %255 = vmatpush1.msra.mxu0 %v254
    %v256 = vand.u32 %v43, 4294901760
    %v257 = vsub.f32 %v43, %v256
    %258 = vmatprep.subr.mxu0 %v257
    %v259 = vand.u32 %v42, 4294901760
    %v260 = vsub.f32 %v42, %v259
    %261 = vmatpush1.msra.mxu0 %v260
    %262 = vmatprep.subr.mxu0 0.0
    %263 = vmatpush2.msra.mxu0 0.0
    %264 = vmatprep.subr.mxu0 0.0
    %265 = vmatpush2.msra.mxu0 0.0
    %266 = vmatprep.subr.mxu0 0.0
    %267 = vmatpush2.msra.mxu0 0.0
    %268 = vmatprep.subr.mxu0 0.0
    %269 = vmatpush2.msra.mxu0 0.0
    %270 = vmatprep.subr.mxu0 0.0
    %271 = vmatpush2.msra.mxu0 0.0
    %272 = vmatprep.subr.mxu0 0.0
    %273 = vmatpush2.msra.mxu0 0.0
    %274 = vmatprep.subr.mxu0 0.0
    %275 = vmatpush2.msra.mxu0 0.0
    %276 = vmatprep.subr.mxu0 0.0
    %277 = vmatpush2.msra.mxu0 0.0
    %278 = vmatprep.subr.mxu0 0.0
    %279 = vmatpush2.msra.mxu0 0.0
    %280 = vmatprep.subr.mxu0 0.0
    %281 = vmatpush2.msra.mxu0 0.0
    %282 = vmatprep.subr.mxu0 0.0
    %283 = vmatpush2.msra.mxu0 0.0
    %284 = vmatprep.subr.mxu0 0.0
    %285 = vmatpush2.msra.mxu0 0.0
    %286 = vmatprep.subr.mxu0 0.0
    %287 = vmatpush2.msra.mxu0 0.0
    %288 = vmatprep.subr.mxu0 0.0
    %289 = vmatpush2.msra.mxu0 0.0
    %290 = vmatprep.subr.mxu0 0.0
    %291 = vmatpush2.msra.mxu0 0.0
    %292 = vmatprep.subr.mxu0 0.0
    %293 = vmatpush2.msra.mxu0 0.0
    %294 = vmatprep.mubr.f32.mxu0 0.0
    %v295 = vand.u32 %v48, 4294901760
    %v296 = vsub.f32 %v48, %v295
    %297 = vmatmul.mubr.f32.gmra.mxu0 %v296
    %v298 = vpop.f32.mrf.mxu0
    %v299 = vadd.f32 %v218, %v298
    %v300 = vpop.f32.mrf.mxu0
    %v301 = vadd.f32 %v220, %v300
    %302 = vdwg.mxu0
    %303 = vmatprep.subr.mxu0 0.0
    %304 = vmatpush1.msra.mxu0 0.0
    %305 = vmatprep.subr.mxu0 0.0
    %306 = vmatpush1.msra.mxu0 0.0
    %307 = vmatprep.subr.mxu0 0.0
    %308 = vmatpush1.msra.mxu0 0.0
    %309 = vmatprep.subr.mxu0 0.0
    %310 = vmatpush1.msra.mxu0 0.0
    %311 = vmatprep.subr.mxu0 0.0
    %312 = vmatpush1.msra.mxu0 0.0
    %313 = vmatprep.subr.mxu0 0.0
    %314 = vmatpush1.msra.mxu0 0.0
    %315 = vmatprep.subr.mxu0 0.0
    %316 = vmatpush1.msra.mxu0 0.0
    %317 = vmatprep.subr.mxu0 0.0
    %318 = vmatpush1.msra.mxu0 0.0
    %319 = vmatprep.subr.mxu0 0.0
    %320 = vmatpush1.msra.mxu0 0.0
    %321 = vmatprep.subr.mxu0 0.0
    %322 = vmatpush1.msra.mxu0 0.0
    %323 = vmatprep.subr.mxu0 0.0
    %324 = vmatpush1.msra.mxu0 0.0
    %325 = vmatprep.subr.mxu0 0.0
    %326 = vmatpush1.msra.mxu0 0.0
    %327 = vmatprep.subr.mxu0 0.0
    %328 = vmatpush1.msra.mxu0 0.0
    %329 = vmatprep.subr.mxu0 0.0
    %330 = vmatpush1.msra.mxu0 0.0
    %v331 = vand.u32 %v45, 4294901760
    %332 = vmatprep.subr.mxu0 %v331
    %v333 = vand.u32 %v44, 4294901760
    %334 = vmatpush1.msra.mxu0 %v333
    %v335 = vand.u32 %v43, 4294901760
    %336 = vmatprep.subr.mxu0 %v335
    %v337 = vand.u32 %v42, 4294901760
    %338 = vmatpush1.msra.mxu0 %v337
    %339 = vmatprep.subr.mxu0 0.0
    %340 = vmatpush2.msra.mxu0 0.0
    %341 = vmatprep.subr.mxu0 0.0
    %342 = vmatpush2.msra.mxu0 0.0
    %343 = vmatprep.subr.mxu0 0.0
    %344 = vmatpush2.msra.mxu0 0.0
    %345 = vmatprep.subr.mxu0 0.0
    %346 = vmatpush2.msra.mxu0 0.0
    %347 = vmatprep.subr.mxu0 0.0
    %348 = vmatpush2.msra.mxu0 0.0
    %349 = vmatprep.subr.mxu0 0.0
    %350 = vmatpush2.msra.mxu0 0.0
    %351 = vmatprep.subr.mxu0 0.0
    %352 = vmatpush2.msra.mxu0 0.0
    %353 = vmatprep.subr.mxu0 0.0
    %354 = vmatpush2.msra.mxu0 0.0
    %355 = vmatprep.subr.mxu0 0.0
    %356 = vmatpush2.msra.mxu0 0.0
    %357 = vmatprep.subr.mxu0 0.0
    %358 = vmatpush2.msra.mxu0 0.0
    %359 = vmatprep.subr.mxu0 0.0
    %360 = vmatpush2.msra.mxu0 0.0
    %361 = vmatprep.subr.mxu0 0.0
    %362 = vmatpush2.msra.mxu0 0.0
    %363 = vmatprep.subr.mxu0 0.0
    %364 = vmatpush2.msra.mxu0 0.0
    %365 = vmatprep.subr.mxu0 0.0
    %366 = vmatpush2.msra.mxu0 0.0
    %367 = vmatprep.subr.mxu0 0.0
    %368 = vmatpush2.msra.mxu0 0.0
    %369 = vmatprep.subr.mxu0 0.0
    %370 = vmatpush2.msra.mxu0 0.0
    %371 = vmatprep.mubr.f32.mxu0 0.0
    %v372 = vand.u32 %v48, 4294901760
    %v373 = vsub.f32 %v48, %v372
    %v374 = vand.u32 %v373, 4294901760
    %375 = vmatmul.mubr.f32.gmra.mxu0 %v374
    %v376 = vpop.f32.mrf.mxu0
    %v377 = vadd.f32 %v299, %v376
    %v378 = vpop.f32.mrf.mxu0
    %v379 = vadd.f32 %v301, %v378
    %380 = vdwg.mxu0
    %381 = vmatprep.subr.mxu0 0.0
    %382 = vmatpush1.msra.mxu0 0.0
    %383 = vmatprep.subr.mxu0 0.0
    %384 = vmatpush1.msra.mxu0 0.0
    %385 = vmatprep.subr.mxu0 0.0
    %386 = vmatpush1.msra.mxu0 0.0
    %387 = vmatprep.subr.mxu0 0.0
    %388 = vmatpush1.msra.mxu0 0.0
    %389 = vmatprep.subr.mxu0 0.0
    %390 = vmatpush1.msra.mxu0 0.0
    %391 = vmatprep.subr.mxu0 0.0
    %392 = vmatpush1.msra.mxu0 0.0
    %393 = vmatprep.subr.mxu0 0.0
    %394 = vmatpush1.msra.mxu0 0.0
    %395 = vmatprep.subr.mxu0 0.0
    %396 = vmatpush1.msra.mxu0 0.0
    %397 = vmatprep.subr.mxu0 0.0
    %398 = vmatpush1.msra.mxu0 0.0
    %399 = vmatprep.subr.mxu0 0.0
    %400 = vmatpush1.msra.mxu0 0.0
    %401 = vmatprep.subr.mxu0 0.0
    %402 = vmatpush1.msra.mxu0 0.0
    %403 = vmatprep.subr.mxu0 0.0
    %404 = vmatpush1.msra.mxu0 0.0
    %405 = vmatprep.subr.mxu0 0.0
    %406 = vmatpush1.msra.mxu0 0.0
    %407 = vmatprep.subr.mxu0 0.0
    %408 = vmatpush1.msra.mxu0 0.0
    %v409 = vand.u32 %v45, 4294901760
    %v410 = vsub.f32 %v45, %v409
    %v411 = vand.u32 %v410, 4294901760
    %412 = vmatprep.subr.mxu0 %v411
    %v413 = vand.u32 %v44, 4294901760
    %v414 = vsub.f32 %v44, %v413
    %v415 = vand.u32 %v414, 4294901760
    %416 = vmatpush1.msra.mxu0 %v415
    %v417 = vand.u32 %v43, 4294901760
    %v418 = vsub.f32 %v43, %v417
    %v419 = vand.u32 %v418, 4294901760
    %420 = vmatprep.subr.mxu0 %v419
    %v421 = vand.u32 %v42, 4294901760
    %v422 = vsub.f32 %v42, %v421
    %v423 = vand.u32 %v422, 4294901760
    %424 = vmatpush1.msra.mxu0 %v423
    %425 = vmatprep.subr.mxu0 0.0
    %426 = vmatpush2.msra.mxu0 0.0
    %427 = vmatprep.subr.mxu0 0.0
    %428 = vmatpush2.msra.mxu0 0.0
    %429 = vmatprep.subr.mxu0 0.0
    %430 = vmatpush2.msra.mxu0 0.0
    %431 = vmatprep.subr.mxu0 0.0
    %432 = vmatpush2.msra.mxu0 0.0
    %433 = vmatprep.subr.mxu0 0.0
    %434 = vmatpush2.msra.mxu0 0.0
    %435 = vmatprep.subr.mxu0 0.0
    %436 = vmatpush2.msra.mxu0 0.0
    %437 = vmatprep.subr.mxu0 0.0
    %438 = vmatpush2.msra.mxu0 0.0
    %439 = vmatprep.subr.mxu0 0.0
    %440 = vmatpush2.msra.mxu0 0.0
    %441 = vmatprep.subr.mxu0 0.0
    %442 = vmatpush2.msra.mxu0 0.0
    %443 = vmatprep.subr.mxu0 0.0
    %444 = vmatpush2.msra.mxu0 0.0
    %445 = vmatprep.subr.mxu0 0.0
    %446 = vmatpush2.msra.mxu0 0.0
    %447 = vmatprep.subr.mxu0 0.0
    %448 = vmatpush2.msra.mxu0 0.0
    %449 = vmatprep.subr.mxu0 0.0
    %450 = vmatpush2.msra.mxu0 0.0
    %451 = vmatprep.subr.mxu0 0.0
    %452 = vmatpush2.msra.mxu0 0.0
    %453 = vmatprep.subr.mxu0 0.0
    %454 = vmatpush2.msra.mxu0 0.0
    %455 = vmatprep.subr.mxu0 0.0
    %456 = vmatpush2.msra.mxu0 0.0
    %457 = vmatprep.mubr.f32.mxu0 0.0
    %v458 = vand.u32 %v48, 4294901760
    %459 = vmatmul.mubr.f32.gmra.mxu0 %v458
    %v460 = vpop.f32.mrf.mxu0
    %v461 = vadd.f32 %v377, %v460
    %v462 = vpop.f32.mrf.mxu0
    %v463 = vadd.f32 %v379, %v462
    %464 = vdwg.mxu0
    %465 = vmatprep.subr.mxu0 0.0
    %466 = vmatpush1.msra.mxu0 0.0
    %467 = vmatprep.subr.mxu0 0.0
    %468 = vmatpush1.msra.mxu0 0.0
    %469 = vmatprep.subr.mxu0 0.0
    %470 = vmatpush1.msra.mxu0 0.0
    %471 = vmatprep.subr.mxu0 0.0
    %472 = vmatpush1.msra.mxu0 0.0
    %473 = vmatprep.subr.mxu0 0.0
    %474 = vmatpush1.msra.mxu0 0.0
    %475 = vmatprep.subr.mxu0 0.0
    %476 = vmatpush1.msra.mxu0 0.0
    %477 = vmatprep.subr.mxu0 0.0
    %478 = vmatpush1.msra.mxu0 0.0
    %479 = vmatprep.subr.mxu0 0.0
    %480 = vmatpush1.msra.mxu0 0.0
    %481 = vmatprep.subr.mxu0 0.0
    %482 = vmatpush1.msra.mxu0 0.0
    %483 = vmatprep.subr.mxu0 0.0
    %484 = vmatpush1.msra.mxu0 0.0
    %485 = vmatprep.subr.mxu0 0.0
    %486 = vmatpush1.msra.mxu0 0.0
    %487 = vmatprep.subr.mxu0 0.0
    %488 = vmatpush1.msra.mxu0 0.0
    %489 = vmatprep.subr.mxu0 0.0
    %490 = vmatpush1.msra.mxu0 0.0
    %491 = vmatprep.subr.mxu0 0.0
    %492 = vmatpush1.msra.mxu0 0.0
    %v493 = vand.u32 %v45, 4294901760
    %494 = vmatprep.subr.mxu0 %v493
    %v495 = vand.u32 %v44, 4294901760
    %496 = vmatpush1.msra.mxu0 %v495
    %v497 = vand.u32 %v43, 4294901760
    %498 = vmatprep.subr.mxu0 %v497
    %v499 = vand.u32 %v42, 4294901760
    %500 = vmatpush1.msra.mxu0 %v499
    %501 = vmatprep.subr.mxu0 0.0
    %502 = vmatpush2.msra.mxu0 0.0
    %503 = vmatprep.subr.mxu0 0.0
    %504 = vmatpush2.msra.mxu0 0.0
    %505 = vmatprep.subr.mxu0 0.0
    %506 = vmatpush2.msra.mxu0 0.0
    %507 = vmatprep.subr.mxu0 0.0
    %508 = vmatpush2.msra.mxu0 0.0
    %509 = vmatprep.subr.mxu0 0.0
    %510 = vmatpush2.msra.mxu0 0.0
    %511 = vmatprep.subr.mxu0 0.0
    %512 = vmatpush2.msra.mxu0 0.0
    %513 = vmatprep.subr.mxu0 0.0
    %514 = vmatpush2.msra.mxu0 0.0
    %515 = vmatprep.subr.mxu0 0.0
    %516 = vmatpush2.msra.mxu0 0.0
    %517 = vmatprep.subr.mxu0 0.0
    %518 = vmatpush2.msra.mxu0 0.0
    %519 = vmatprep.subr.mxu0 0.0
    %520 = vmatpush2.msra.mxu0 0.0
    %521 = vmatprep.subr.mxu0 0.0
    %522 = vmatpush2.msra.mxu0 0.0
    %523 = vmatprep.subr.mxu0 0.0
    %524 = vmatpush2.msra.mxu0 0.0
    %525 = vmatprep.subr.mxu0 0.0
    %526 = vmatpush2.msra.mxu0 0.0
    %527 = vmatprep.subr.mxu0 0.0
    %528 = vmatpush2.msra.mxu0 0.0
    %529 = vmatprep.subr.mxu0 0.0
    %530 = vmatpush2.msra.mxu0 0.0
    %531 = vmatprep.subr.mxu0 0.0
    %532 = vmatpush2.msra.mxu0 0.0
    %533 = vmatprep.mubr.f32.mxu0 0.0
    %v534 = vand.u32 %v48, 4294901760
    %535 = vmatmul.mubr.f32.gmra.mxu0 %v534
    %v536 = vpop.f32.mrf.mxu0
    %v537 = vadd.f32 %v461, %v536
    %v538 = vpop.f32.mrf.mxu0
    %v539 = vadd.f32 %v463, %v538
    %540 = vdwg.mxu0
    %v543 = vcombine.low %v537, %v539
    %v544 = vcombine.high %v537, %v539
    %547 = vst [vmem:[#allocation6] sm:$0xff] %v543
    %548 = vst [vmem:[#allocation6 + $0x8] sm:$0xff] %v544
    %v549 = vmul.f32 %v537, %v537
    %v550 = vmul.f32 %v539, %v539
    %v551 = vadd.f32 %v549, %v550
    %552 = vadd.xlane.f32.xlu0 %v551
    %v553 = vpop.xlane.xlu0 %552
    %v554 = vmul.f32 %v553, -0.5
    %v555 = vadd.f32 %v554, -14.703016
    %556 = vst [vmem:[#allocation7] sm:$0xff] %v555
    // Predicated region
    $region18: #{_dft_forward_impl.1} parent=1 // pred_check
      _
    $region19: #{_dft_forward_impl.1} parent=1 // pred_check_branch
      %558 = sbr.rel (0) target = $region21
    $region20: #{_dft_forward_impl.1} parent=1 // pred_region
      // Predicated region
      $region22: #{_dft_forward_impl.1} parent=20 // pred_check
        _
      $region23: #{_dft_forward_impl.1} parent=20 // pred_check_branch
        %560 = sbr.rel (0) target = $region25
      $region24: #{_dft_forward_impl.1} parent=20 // pred_region
        // Predicated region
        $region26: #{_dft_forward_impl.1} parent=24 // pred_check
          _
        $region27: #{_dft_forward_impl.1} parent=24 // pred_check_branch
          %562 = sbr.rel (0) target = $region29
        $region28: #{_dft_forward_impl.1} parent=24 // pred_region
          // Predicated region
          $region41: #{_dft_forward_impl.1} parent=28 // pred_check
            _
          $region42: #{_dft_forward_impl.1} parent=28 // pred_check_branch
            %578 = sbr.rel (0) target = $region44
          $region43: #{_dft_forward_impl.1} parent=28 // pred_region
            loop: start=0, step=1, limit=1
            $region45: #{_dft_forward_impl.1} parent=43 // loop_pre_header
              _
            $region46: #{_dft_forward_impl.1} parent=43 // loop_header
              %s580 = sphi 0, %s584
              %p581 = scmp.ge.s32.totalorder %s580, 1
              %s585 = sphi [#allocation6], [#allocation6]
              %s586 = sphi %s2, %s2
            $region47: #{_dft_forward_impl.1} parent=43 // loop_header_branch
              %583 = sbr.rel (%p581) target = $region51
            $region48: #{_dft_forward_impl.1} parent=43 // loop_body
              %v587 = vld [vmem:[%s585] sm:$0xff]
              %588 = vst [vmem:[%s586] sm:$0xff] %v587
            $region49: #{_dft_forward_impl.1} parent=43 // loop_footer
              %s584 = sadd.s32 1, %s580
            $region50: #{_dft_forward_impl.1} parent=43 // loop_footer_branch
              %579 = sbr.rel target = $region46
            $region51: #{_dft_forward_impl.1} parent=43 // loop_exit
              _
          $region44: #{_dft_forward_impl.1} parent=28 // pred_fallthru
            _
          // Predicated region
          $region52: #{_dft_forward_impl.1} parent=28 // pred_check
            _
          $region53: #{_dft_forward_impl.1} parent=28 // pred_check_branch
            %590 = sbr.rel target = $region55
          $region54: #{_dft_forward_impl.1} parent=28 // pred_region
            _
          $region55: #{_dft_forward_impl.1} parent=28 // pred_fallthru
            _
        $region29: #{_dft_forward_impl.1} parent=24 // pred_fallthru
          _
        // Predicated region
        $region30: #{_dft_forward_impl.1} parent=24 // pred_check
          _
        $region31: #{_dft_forward_impl.1} parent=24 // pred_check_branch
          %564 = sbr.rel target = $region33
        $region32: #{_dft_forward_impl.1} parent=24 // pred_region
          %s566 = ssub.s32 256, 1
          loop: start=0, step=1, limit=1
          $region34: #{_dft_forward_impl.1} parent=32 // loop_pre_header
            _
          $region35: #{_dft_forward_impl.1} parent=32 // loop_header
            %s568 = sphi 0, %s572
            %p569 = scmp.ge.s32.totalorder %s568, 1
            %s573 = sphi [#allocation6], [#allocation6]
            %s574 = sphi %s2, %s2
          $region36: #{_dft_forward_impl.1} parent=32 // loop_header_branch
            %571 = sbr.rel (%p569) target = $region40
          $region37: #{_dft_forward_impl.1} parent=32 // loop_body
            %v575 = vld [vmem:[%s573] sm:%s566]
            %576 = vst [vmem:[%s574] sm:%s566] %v575
          $region38: #{_dft_forward_impl.1} parent=32 // loop_footer
            %s572 = sadd.s32 1, %s568
          $region39: #{_dft_forward_impl.1} parent=32 // loop_footer_branch
            %567 = sbr.rel target = $region35
          $region40: #{_dft_forward_impl.1} parent=32 // loop_exit
            _
        $region33: #{_dft_forward_impl.1} parent=24 // pred_fallthru
          _
      $region25: #{_dft_forward_impl.1} parent=20 // pred_fallthru
        _
      %591 = vnop
    $region21: #{_dft_forward_impl.1} parent=1 // pred_fallthru
      _
    // Predicated region
    $region56: #{_dft_forward_impl.1} parent=1 // pred_check
      _
    $region57: #{_dft_forward_impl.1} parent=1 // pred_check_branch
      %593 = sbr.rel (0) target = $region59
    $region58: #{_dft_forward_impl.1} parent=1 // pred_region
      // Predicated region
      $region60: #{_dft_forward_impl.1} parent=58 // pred_check
        _
      $region61: #{_dft_forward_impl.1} parent=58 // pred_check_branch
        %595 = sbr.rel (0) target = $region63
      $region62: #{_dft_forward_impl.1} parent=58 // pred_region
        // Predicated region
        $region64: #{_dft_forward_impl.1} parent=62 // pred_check
          _
        $region65: #{_dft_forward_impl.1} parent=62 // pred_check_branch
          %597 = sbr.rel target = $region67
        $region66: #{_dft_forward_impl.1} parent=62 // pred_region
          // Predicated region
          $region79: #{_dft_forward_impl.1} parent=66 // pred_check
            _
          $region80: #{_dft_forward_impl.1} parent=66 // pred_check_branch
            %613 = sbr.rel (0) target = $region82
          $region81: #{_dft_forward_impl.1} parent=66 // pred_region
            %s615 = ssub.s32 16, 1
            loop: start=0, step=1, limit=1
            $region83: #{_dft_forward_impl.1} parent=81 // loop_pre_header
              _
            $region84: #{_dft_forward_impl.1} parent=81 // loop_header
              %s617 = sphi 0, %s621
              %p618 = scmp.ge.s32.totalorder %s617, 1
              %s622 = sphi [#allocation7], [#allocation7]
              %s623 = sphi %s3, %s3
            $region85: #{_dft_forward_impl.1} parent=81 // loop_header_branch
              %620 = sbr.rel (%p618) target = $region89
            $region86: #{_dft_forward_impl.1} parent=81 // loop_body
              %v624 = vld [vmem:[%s622] sm:%s615]
              %625 = vst [vmem:[%s623] sm:%s615] %v624
            $region87: #{_dft_forward_impl.1} parent=81 // loop_footer
              %s621 = sadd.s32 1, %s617
            $region88: #{_dft_forward_impl.1} parent=81 // loop_footer_branch
              %616 = sbr.rel target = $region84
            $region89: #{_dft_forward_impl.1} parent=81 // loop_exit
              _
          $region82: #{_dft_forward_impl.1} parent=66 // pred_fallthru
            _
        $region67: #{_dft_forward_impl.1} parent=62 // pred_fallthru
          _
        // Predicated region
        $region68: #{_dft_forward_impl.1} parent=62 // pred_check
          _
        $region69: #{_dft_forward_impl.1} parent=62 // pred_check_branch
          %599 = sbr.rel (0) target = $region71
        $region70: #{_dft_forward_impl.1} parent=62 // pred_region
          %s601 = ssub.s32 16, 1
          loop: start=0, step=1, limit=1
          $region72: #{_dft_forward_impl.1} parent=70 // loop_pre_header
            _
          $region73: #{_dft_forward_impl.1} parent=70 // loop_header
            %s603 = sphi 0, %s607
            %p604 = scmp.ge.s32.totalorder %s603, 1
            %s608 = sphi [#allocation7], [#allocation7]
            %s609 = sphi %s3, %s3
          $region74: #{_dft_forward_impl.1} parent=70 // loop_header_branch
            %606 = sbr.rel (%p604) target = $region78
          $region75: #{_dft_forward_impl.1} parent=70 // loop_body
            %v610 = vld [vmem:[%s608] sm:%s601]
            %611 = vst [vmem:[%s609] sm:%s601] %v610
          $region76: #{_dft_forward_impl.1} parent=70 // loop_footer
            %s607 = sadd.s32 1, %s603
          $region77: #{_dft_forward_impl.1} parent=70 // loop_footer_branch
            %602 = sbr.rel target = $region73
          $region78: #{_dft_forward_impl.1} parent=70 // loop_exit
            _
        $region71: #{_dft_forward_impl.1} parent=62 // pred_fallthru
          _
      $region63: #{_dft_forward_impl.1} parent=58 // pred_fallthru
        _
      %626 = vnop
    $region59: #{_dft_forward_impl.1} parent=1 // pred_fallthru
      _
    // Predicated region
    $region90: #{_dft_forward_impl.1} parent=1 // pred_check
      _
    $region91: #{_dft_forward_impl.1} parent=1 // pred_check_branch
      %628 = sbr.rel (0) target = $region93
    $region92: #{_dft_forward_impl.1} parent=1 // pred_region
      _
    $region93: #{_dft_forward_impl.1} parent=1 // pred_fallthru
      _
    // Predicated region
    $region94: #{_dft_forward_impl.1} parent=1 // pred_check
      _
    $region95: #{_dft_forward_impl.1} parent=1 // pred_check_branch
      %630 = sbr.rel (0) target = $region97
    $region96: #{_dft_forward_impl.1} parent=1 // pred_region
      _
    $region97: #{_dft_forward_impl.1} parent=1 // pred_fallthru
      _
    %631 = vsyncpa [#allocation3], 1
    %632 = vsyncpa [#allocation5], 1

</llo_original>
